<compile_context>
chip_gen: v7x
topology: tpu7x:2x2x1
jax: 0.10.0
libtpu: 0.0.40
codegen_flags: <defaults>
</compile_context>

<pallas_src>
import jax
import jax.numpy as jnp
from jax import lax
from jax.experimental import pallas as pl
from jax.experimental.pallas import tpu as pltpu

_LANE = 128        # lane width: camera-tile granularity
_MAX_TILE = 1024   # cameras per grid step (multiple of 128); VMEM use is tiny


def _tile_plan(batch):
    """Pick (padded_batch, tile) so tile is a multiple of 128 and divides padded_batch."""
    bp = ((max(batch, 1) + _LANE - 1) // _LANE) * _LANE
    if bp <= _MAX_TILE:
        return bp, bp                      # single grid step for small batches
    tb = _MAX_TILE
    bp = ((bp + tb - 1) // tb) * tb
    return bp, tb


def _w2c_kernel(r_ref, t_ref, o_ref):
    """r_ref: (4, TB) quats (w,x,y,z) rows; t_ref: (3, TB); o_ref: (16, TB) flat Rt."""
    q = r_ref[...]                                     # (4, TB)
    t = t_ref[...]                                     # (3, TB)

    # F.normalize(eps=1e-12): q / max(||q||, 1e-12)  (rsqrt -> EUP slot; no XLU reduce).
    ss = (q[0:1] * q[0:1] + q[1:2] * q[1:2]
          + q[2:3] * q[2:3] + q[3:4] * q[3:4])         # (1, TB)
    inv = lax.rsqrt(jnp.maximum(ss, 1e-24))
    w = q[0:1] * inv
    x = q[1:2] * inv
    y = q[2:3] * inv
    z = q[3:4] * inv

    xx = x * x; yy = y * y; zz = z * z
    xy = x * y; xz = x * z; yz = y * z
    wx = w * x; wy = w * y; wz = w * z
    one = jnp.ones_like(ss)

    # Flattened 4x4 Rt (row-major element index k = 4*i + j), cameras along lanes.
    # Rows 12, 13, 14 stay zero.
    entries = (
        (0,  one - 2.0 * (yy + zz)), (1,  2.0 * (xy - wz)),
        (2,  2.0 * (xz + wy)),       (3,  t[0:1]),
        (4,  2.0 * (xy + wz)),       (5,  one - 2.0 * (xx + zz)),
        (6,  2.0 * (yz - wx)),       (7,  t[1:2]),
        (8,  2.0 * (xz - wy)),       (9,  2.0 * (yz + wx)),
        (10, one - 2.0 * (xx + yy)), (11, t[2:3]),
        (15, one),
    )

    # Assemble the (16, TB) tile with iota + select (sublane broadcasts only),
    # then store once as a lane-dense, unmasked slab.
    ridx = lax.broadcasted_iota(jnp.int32, o_ref.shape, 0)
    acc = jnp.zeros(o_ref.shape, jnp.float32)
    for k, v in entries:
        acc = acc + jnp.where(ridx == k, v, 0.0)
    o_ref[...] = acc


@jax.jit
def learn_pose_forward_batched(cam_ids, r4, t3):
    """Batched LearnPose.forward.

    cam_ids: (B,)  int32 camera indices
    r4:      (4, num_cams) float32 quaternions (w,x,y,z) — this is r_param[0]
    t3:      (3, num_cams) float32 translations        — this is t_param
    returns: (B, 4, 4) float32 world-to-view matrices.

    Note: out-of-range cam_ids are clamped (PyTorch indexing would raise).
    """
    B = cam_ids.shape[0]
    Bp, TB = _tile_plan(B)

    cam_p = jnp.pad(cam_ids.astype(jnp.int32), (0, Bp - B))
    # Camera-row gather happens in XLA, outside the kernel (tiny gather, fuses).
    r_sel = jnp.take(r4.astype(jnp.float32), cam_p, axis=1, mode="clip")   # (4, Bp)
    t_sel = jnp.take(t3.astype(jnp.float32), cam_p, axis=1, mode="clip")   # (3, Bp)

    out = pl.pallas_call(
        _w2c_kernel,
        out_shape=jax.ShapeDtypeStruct((16, Bp), jnp.float32),
        grid=(Bp // TB,),
        in_specs=[
            pl.BlockSpec((4, TB), lambda i: (0, i)),
            pl.BlockSpec((3, TB), lambda i: (0, i)),
        ],
        out_specs=pl.BlockSpec((16, TB), lambda i: (0, i)),
        compiler_params=pltpu.CompilerParams(
            dimension_semantics=("parallel",),   # v7x: splits camera tiles over 2 TCs
        ),
    )(r_sel, t_sel)

    # (16, Bp) -> (B, 4, 4): tiny transpose/reshape in the wrapper, fused by XLA.
    return out.T[:B].reshape(B, 4, 4)


def learn_pose_forward(cam_id, r_param, t_param):
    """Single-camera path matching LearnPose.forward(cam_id) -> (4, 4).

    r_param: (1, 4, num_cams), t_param: (3, num_cams)  (PyTorch parameter layout).
    """
    cam = jnp.asarray([int(cam_id)], dtype=jnp.int32)
    return learn_pose_forward_batched(cam, r_param[0], t_param)[0]


def _ref_forward(cam_id, r_param, t_param):
    """Pure-JAX reference matching the PyTorch forward."""
    q = r_param[0, :, cam_id]
    q = q / jnp.maximum(jnp.sqrt(jnp.sum(q * q)), 1e-12)
    w, x, y, z = q[0], q[1], q[2], q[3]
    R = jnp.array([
        [1 - 2 * (y * y + z * z), 2 * (x * y - w * z), 2 * (x * z + w * y)],
        [2 * (x * y + w * z), 1 - 2 * (x * x + z * z), 2 * (y * z - w * x)],
        [2 * (x * z - w * y), 2 * (y * z + w * x), 1 - 2 * (x * x + y * y)],
    ], dtype=jnp.float32)
    Rt = jnp.eye(4, dtype=jnp.float32)
    Rt = Rt.at[:3, :3].set(R)
    Rt = Rt.at[:3, 3].set(t_param[:, cam_id])
    return Rt


if __name__ == "__main__":
    num_cams = 8

    # Parameter shapes from LearnPose.__init__: r (1, 4, num_cams), t (3, num_cams).
    # (__init__ defaults are identity quaternion / zero translation; deterministic
    # random values are used so the quaternion math is actually exercised.)
    key = jax.random.PRNGKey(0)
    k_r, k_t = jax.random.split(key)
    r_param = jax.random.normal(k_r, (1, 4, num_cams), dtype=jnp.float32)
    t_param = jax.random.normal(k_t, (3, num_cams), dtype=jnp.float32)

    # Batched forward over all cameras.
    cam_ids = jnp.arange(num_cams, dtype=jnp.int32)
    out = jax.block_until_ready(
        learn_pose_forward_batched(cam_ids, r_param[0], t_param))

    ref = jnp.stack([_ref_forward(c, r_param, t_param) for c in range(num_cams)])
    assert out.shape == (num_cams, 4, 4) and out.dtype == jnp.float32
    assert jnp.allclose(out, ref, atol=1e-5), (out, ref)

    # Single-camera path (exact module semantics: forward(cam_id) -> (4, 4)).
    single = jax.block_until_ready(learn_pose_forward(3, r_param, t_param))
    assert single.shape == (4, 4)
    assert jnp.allclose(single, _ref_forward(3, r_param, t_param), atol=1e-5)

    print("KERNEL_OK")
</pallas_src>

<mosaic_0001>
module attributes {stable_mosaic.version = 11 : i64} {
  func.func @_w2c_kernel(%arg0: i32, %arg1: memref<4x128xf32, #tpu.memory_space<vmem>>, %arg2: memref<3x128xf32, #tpu.memory_space<vmem>>, %arg3: memref<16x128xf32, #tpu.memory_space<vmem>>) attributes {dimension_semantics = [#tpu.dimension_semantics<parallel>], iteration_bounds = array<i64: 1>, scalar_prefetch = 0 : i64, scratch_operands = 0 : i64, tpu.core_type = #tpu.core_type<tc>, window_params = [{transform_indices = @transform_0, window_bounds = array<i64: 4, 128>}, {transform_indices = @transform_1, window_bounds = array<i64: 3, 128>}, {transform_indices = @transform_2, window_bounds = array<i64: 16, 128>}]} {
    %c0 = arith.constant 0 : index
    %c0_0 = arith.constant 0 : index
    %0 = vector.load %arg1[%c0, %c0_0] : memref<4x128xf32, #tpu.memory_space<vmem>>, vector<4x128xf32>
    %c0_1 = arith.constant 0 : index
    %c0_2 = arith.constant 0 : index
    %1 = vector.load %arg2[%c0_1, %c0_2] : memref<3x128xf32, #tpu.memory_space<vmem>>, vector<3x128xf32>
    %2 = vector.extract_strided_slice %0 {offsets = [0, 0], sizes = [1, 128], strides = [1, 1]} : vector<4x128xf32> to vector<1x128xf32>
    %3 = vector.extract_strided_slice %0 {offsets = [0, 0], sizes = [1, 128], strides = [1, 1]} : vector<4x128xf32> to vector<1x128xf32>
    %4 = arith.mulf %2, %3 : vector<1x128xf32>
    %5 = vector.extract_strided_slice %0 {offsets = [1, 0], sizes = [1, 128], strides = [1, 1]} : vector<4x128xf32> to vector<1x128xf32>
    %6 = vector.extract_strided_slice %0 {offsets = [1, 0], sizes = [1, 128], strides = [1, 1]} : vector<4x128xf32> to vector<1x128xf32>
    %7 = arith.mulf %5, %6 : vector<1x128xf32>
    %8 = arith.addf %4, %7 : vector<1x128xf32>
    %9 = vector.extract_strided_slice %0 {offsets = [2, 0], sizes = [1, 128], strides = [1, 1]} : vector<4x128xf32> to vector<1x128xf32>
    %10 = vector.extract_strided_slice %0 {offsets = [2, 0], sizes = [1, 128], strides = [1, 1]} : vector<4x128xf32> to vector<1x128xf32>
    %11 = arith.mulf %9, %10 : vector<1x128xf32>
    %12 = arith.addf %8, %11 : vector<1x128xf32>
    %13 = vector.extract_strided_slice %0 {offsets = [3, 0], sizes = [1, 128], strides = [1, 1]} : vector<4x128xf32> to vector<1x128xf32>
    %14 = vector.extract_strided_slice %0 {offsets = [3, 0], sizes = [1, 128], strides = [1, 1]} : vector<4x128xf32> to vector<1x128xf32>
    %15 = arith.mulf %13, %14 : vector<1x128xf32>
    %16 = arith.addf %12, %15 : vector<1x128xf32>
    %cst = arith.constant 1.000000e-24 : f32
    %17 = vector.broadcast %cst : f32 to vector<1x128xf32>
    %18 = arith.maximumf %16, %17 : vector<1x128xf32>
    %19 = math.rsqrt %18 : vector<1x128xf32>
    %20 = vector.extract_strided_slice %0 {offsets = [0, 0], sizes = [1, 128], strides = [1, 1]} : vector<4x128xf32> to vector<1x128xf32>
    %21 = arith.mulf %20, %19 : vector<1x128xf32>
    %22 = vector.extract_strided_slice %0 {offsets = [1, 0], sizes = [1, 128], strides = [1, 1]} : vector<4x128xf32> to vector<1x128xf32>
    %23 = arith.mulf %22, %19 : vector<1x128xf32>
    %24 = vector.extract_strided_slice %0 {offsets = [2, 0], sizes = [1, 128], strides = [1, 1]} : vector<4x128xf32> to vector<1x128xf32>
    %25 = arith.mulf %24, %19 : vector<1x128xf32>
    %26 = vector.extract_strided_slice %0 {offsets = [3, 0], sizes = [1, 128], strides = [1, 1]} : vector<4x128xf32> to vector<1x128xf32>
    %27 = arith.mulf %26, %19 : vector<1x128xf32>
    %28 = arith.mulf %23, %23 : vector<1x128xf32>
    %29 = arith.mulf %25, %25 : vector<1x128xf32>
    %30 = arith.mulf %27, %27 : vector<1x128xf32>
    %31 = arith.mulf %23, %25 : vector<1x128xf32>
    %32 = arith.mulf %23, %27 : vector<1x128xf32>
    %33 = arith.mulf %25, %27 : vector<1x128xf32>
    %34 = arith.mulf %21, %23 : vector<1x128xf32>
    %35 = arith.mulf %21, %25 : vector<1x128xf32>
    %36 = arith.mulf %21, %27 : vector<1x128xf32>
    %cst_3 = arith.constant 1.000000e+00 : f32
    %37 = vector.broadcast %cst_3 : f32 to vector<1x128xf32>
    %38 = arith.addf %29, %30 : vector<1x128xf32>
    %cst_4 = arith.constant 2.000000e+00 : f32
    %39 = vector.broadcast %cst_4 : f32 to vector<1x128xf32>
    %40 = arith.mulf %39, %38 : vector<1x128xf32>
    %41 = arith.subf %37, %40 : vector<1x128xf32>
    %42 = arith.subf %31, %36 : vector<1x128xf32>
    %cst_5 = arith.constant 2.000000e+00 : f32
    %43 = vector.broadcast %cst_5 : f32 to vector<1x128xf32>
    %44 = arith.mulf %43, %42 : vector<1x128xf32>
    %45 = arith.addf %32, %35 : vector<1x128xf32>
    %cst_6 = arith.constant 2.000000e+00 : f32
    %46 = vector.broadcast %cst_6 : f32 to vector<1x128xf32>
    %47 = arith.mulf %46, %45 : vector<1x128xf32>
    %48 = vector.extract_strided_slice %1 {offsets = [0, 0], sizes = [1, 128], strides = [1, 1]} : vector<3x128xf32> to vector<1x128xf32>
    %49 = arith.addf %31, %36 : vector<1x128xf32>
    %cst_7 = arith.constant 2.000000e+00 : f32
    %50 = vector.broadcast %cst_7 : f32 to vector<1x128xf32>
    %51 = arith.mulf %50, %49 : vector<1x128xf32>
    %52 = arith.addf %28, %30 : vector<1x128xf32>
    %cst_8 = arith.constant 2.000000e+00 : f32
    %53 = vector.broadcast %cst_8 : f32 to vector<1x128xf32>
    %54 = arith.mulf %53, %52 : vector<1x128xf32>
    %55 = arith.subf %37, %54 : vector<1x128xf32>
    %56 = arith.subf %33, %34 : vector<1x128xf32>
    %cst_9 = arith.constant 2.000000e+00 : f32
    %57 = vector.broadcast %cst_9 : f32 to vector<1x128xf32>
    %58 = arith.mulf %57, %56 : vector<1x128xf32>
    %59 = vector.extract_strided_slice %1 {offsets = [1, 0], sizes = [1, 128], strides = [1, 1]} : vector<3x128xf32> to vector<1x128xf32>
    %60 = arith.subf %32, %35 : vector<1x128xf32>
    %cst_10 = arith.constant 2.000000e+00 : f32
    %61 = vector.broadcast %cst_10 : f32 to vector<1x128xf32>
    %62 = arith.mulf %61, %60 : vector<1x128xf32>
    %63 = arith.addf %33, %34 : vector<1x128xf32>
    %cst_11 = arith.constant 2.000000e+00 : f32
    %64 = vector.broadcast %cst_11 : f32 to vector<1x128xf32>
    %65 = arith.mulf %64, %63 : vector<1x128xf32>
    %66 = arith.addf %28, %29 : vector<1x128xf32>
    %cst_12 = arith.constant 2.000000e+00 : f32
    %67 = vector.broadcast %cst_12 : f32 to vector<1x128xf32>
    %68 = arith.mulf %67, %66 : vector<1x128xf32>
    %69 = arith.subf %37, %68 : vector<1x128xf32>
    %70 = vector.extract_strided_slice %1 {offsets = [2, 0], sizes = [1, 128], strides = [1, 1]} : vector<3x128xf32> to vector<1x128xf32>
    %71 = tpu.iota {dimensions = array<i32: 0>} : vector<16x128xi32>
    %cst_13 = arith.constant 0.000000e+00 : f32
    %72 = vector.broadcast %cst_13 : f32 to vector<16x128xf32>
    %c0_i32 = arith.constant 0 : i32
    %73 = vector.broadcast %c0_i32 : i32 to vector<16x128xi32>
    %74 = arith.cmpi eq, %71, %73 : vector<16x128xi32>
    %cst_14 = arith.constant 0.000000e+00 : f32
    %75 = vector.shape_cast %41 : vector<1x128xf32> to vector<1x128xf32>
    %76 = vector.broadcast %75 : vector<1x128xf32> to vector<16x128xf32>
    %77 = vector.broadcast %cst_14 : f32 to vector<16x128xf32>
    %78 = arith.select %74, %76, %77 : vector<16x128xi1>, vector<16x128xf32>
    %79 = arith.addf %72, %78 : vector<16x128xf32>
    %c1_i32 = arith.constant 1 : i32
    %80 = vector.broadcast %c1_i32 : i32 to vector<16x128xi32>
    %81 = arith.cmpi eq, %71, %80 : vector<16x128xi32>
    %cst_15 = arith.constant 0.000000e+00 : f32
    %82 = vector.shape_cast %44 : vector<1x128xf32> to vector<1x128xf32>
    %83 = vector.broadcast %82 : vector<1x128xf32> to vector<16x128xf32>
    %84 = vector.broadcast %cst_15 : f32 to vector<16x128xf32>
    %85 = arith.select %81, %83, %84 : vector<16x128xi1>, vector<16x128xf32>
    %86 = arith.addf %79, %85 : vector<16x128xf32>
    %c2_i32 = arith.constant 2 : i32
    %87 = vector.broadcast %c2_i32 : i32 to vector<16x128xi32>
    %88 = arith.cmpi eq, %71, %87 : vector<16x128xi32>
    %cst_16 = arith.constant 0.000000e+00 : f32
    %89 = vector.shape_cast %47 : vector<1x128xf32> to vector<1x128xf32>
    %90 = vector.broadcast %89 : vector<1x128xf32> to vector<16x128xf32>
    %91 = vector.broadcast %cst_16 : f32 to vector<16x128xf32>
    %92 = arith.select %88, %90, %91 : vector<16x128xi1>, vector<16x128xf32>
    %93 = arith.addf %86, %92 : vector<16x128xf32>
    %c3_i32 = arith.constant 3 : i32
    %94 = vector.broadcast %c3_i32 : i32 to vector<16x128xi32>
    %95 = arith.cmpi eq, %71, %94 : vector<16x128xi32>
    %cst_17 = arith.constant 0.000000e+00 : f32
    %96 = vector.shape_cast %48 : vector<1x128xf32> to vector<1x128xf32>
    %97 = vector.broadcast %96 : vector<1x128xf32> to vector<16x128xf32>
    %98 = vector.broadcast %cst_17 : f32 to vector<16x128xf32>
    %99 = arith.select %95, %97, %98 : vector<16x128xi1>, vector<16x128xf32>
    %100 = arith.addf %93, %99 : vector<16x128xf32>
    %c4_i32 = arith.constant 4 : i32
    %101 = vector.broadcast %c4_i32 : i32 to vector<16x128xi32>
    %102 = arith.cmpi eq, %71, %101 : vector<16x128xi32>
    %cst_18 = arith.constant 0.000000e+00 : f32
    %103 = vector.shape_cast %51 : vector<1x128xf32> to vector<1x128xf32>
    %104 = vector.broadcast %103 : vector<1x128xf32> to vector<16x128xf32>
    %105 = vector.broadcast %cst_18 : f32 to vector<16x128xf32>
    %106 = arith.select %102, %104, %105 : vector<16x128xi1>, vector<16x128xf32>
    %107 = arith.addf %100, %106 : vector<16x128xf32>
    %c5_i32 = arith.constant 5 : i32
    %108 = vector.broadcast %c5_i32 : i32 to vector<16x128xi32>
    %109 = arith.cmpi eq, %71, %108 : vector<16x128xi32>
    %cst_19 = arith.constant 0.000000e+00 : f32
    %110 = vector.shape_cast %55 : vector<1x128xf32> to vector<1x128xf32>
    %111 = vector.broadcast %110 : vector<1x128xf32> to vector<16x128xf32>
    %112 = vector.broadcast %cst_19 : f32 to vector<16x128xf32>
    %113 = arith.select %109, %111, %112 : vector<16x128xi1>, vector<16x128xf32>
    %114 = arith.addf %107, %113 : vector<16x128xf32>
    %c6_i32 = arith.constant 6 : i32
    %115 = vector.broadcast %c6_i32 : i32 to vector<16x128xi32>
    %116 = arith.cmpi eq, %71, %115 : vector<16x128xi32>
    %cst_20 = arith.constant 0.000000e+00 : f32
    %117 = vector.shape_cast %58 : vector<1x128xf32> to vector<1x128xf32>
    %118 = vector.broadcast %117 : vector<1x128xf32> to vector<16x128xf32>
    %119 = vector.broadcast %cst_20 : f32 to vector<16x128xf32>
    %120 = arith.select %116, %118, %119 : vector<16x128xi1>, vector<16x128xf32>
    %121 = arith.addf %114, %120 : vector<16x128xf32>
    %c7_i32 = arith.constant 7 : i32
    %122 = vector.broadcast %c7_i32 : i32 to vector<16x128xi32>
    %123 = arith.cmpi eq, %71, %122 : vector<16x128xi32>
    %cst_21 = arith.constant 0.000000e+00 : f32
    %124 = vector.shape_cast %59 : vector<1x128xf32> to vector<1x128xf32>
    %125 = vector.broadcast %124 : vector<1x128xf32> to vector<16x128xf32>
    %126 = vector.broadcast %cst_21 : f32 to vector<16x128xf32>
    %127 = arith.select %123, %125, %126 : vector<16x128xi1>, vector<16x128xf32>
    %128 = arith.addf %121, %127 : vector<16x128xf32>
    %c8_i32 = arith.constant 8 : i32
    %129 = vector.broadcast %c8_i32 : i32 to vector<16x128xi32>
    %130 = arith.cmpi eq, %71, %129 : vector<16x128xi32>
    %cst_22 = arith.constant 0.000000e+00 : f32
    %131 = vector.shape_cast %62 : vector<1x128xf32> to vector<1x128xf32>
    %132 = vector.broadcast %131 : vector<1x128xf32> to vector<16x128xf32>
    %133 = vector.broadcast %cst_22 : f32 to vector<16x128xf32>
    %134 = arith.select %130, %132, %133 : vector<16x128xi1>, vector<16x128xf32>
    %135 = arith.addf %128, %134 : vector<16x128xf32>
    %c9_i32 = arith.constant 9 : i32
    %136 = vector.broadcast %c9_i32 : i32 to vector<16x128xi32>
    %137 = arith.cmpi eq, %71, %136 : vector<16x128xi32>
    %cst_23 = arith.constant 0.000000e+00 : f32
    %138 = vector.shape_cast %65 : vector<1x128xf32> to vector<1x128xf32>
    %139 = vector.broadcast %138 : vector<1x128xf32> to vector<16x128xf32>
    %140 = vector.broadcast %cst_23 : f32 to vector<16x128xf32>
    %141 = arith.select %137, %139, %140 : vector<16x128xi1>, vector<16x128xf32>
    %142 = arith.addf %135, %141 : vector<16x128xf32>
    %c10_i32 = arith.constant 10 : i32
    %143 = vector.broadcast %c10_i32 : i32 to vector<16x128xi32>
    %144 = arith.cmpi eq, %71, %143 : vector<16x128xi32>
    %cst_24 = arith.constant 0.000000e+00 : f32
    %145 = vector.shape_cast %69 : vector<1x128xf32> to vector<1x128xf32>
    %146 = vector.broadcast %145 : vector<1x128xf32> to vector<16x128xf32>
    %147 = vector.broadcast %cst_24 : f32 to vector<16x128xf32>
    %148 = arith.select %144, %146, %147 : vector<16x128xi1>, vector<16x128xf32>
    %149 = arith.addf %142, %148 : vector<16x128xf32>
    %c11_i32 = arith.constant 11 : i32
    %150 = vector.broadcast %c11_i32 : i32 to vector<16x128xi32>
    %151 = arith.cmpi eq, %71, %150 : vector<16x128xi32>
    %cst_25 = arith.constant 0.000000e+00 : f32
    %152 = vector.shape_cast %70 : vector<1x128xf32> to vector<1x128xf32>
    %153 = vector.broadcast %152 : vector<1x128xf32> to vector<16x128xf32>
    %154 = vector.broadcast %cst_25 : f32 to vector<16x128xf32>
    %155 = arith.select %151, %153, %154 : vector<16x128xi1>, vector<16x128xf32>
    %156 = arith.addf %149, %155 : vector<16x128xf32>
    %c15_i32 = arith.constant 15 : i32
    %157 = vector.broadcast %c15_i32 : i32 to vector<16x128xi32>
    %158 = arith.cmpi eq, %71, %157 : vector<16x128xi32>
    %cst_26 = arith.constant 0.000000e+00 : f32
    %159 = vector.shape_cast %37 : vector<1x128xf32> to vector<1x128xf32>
    %160 = vector.broadcast %159 : vector<1x128xf32> to vector<16x128xf32>
    %161 = vector.broadcast %cst_26 : f32 to vector<16x128xf32>
    %162 = arith.select %158, %160, %161 : vector<16x128xi1>, vector<16x128xf32>
    %163 = arith.addf %156, %162 : vector<16x128xf32>
    %c0_27 = arith.constant 0 : index
    %c0_28 = arith.constant 0 : index
    %164 = vector.load %arg3[%c0_27, %c0_28] : memref<16x128xf32, #tpu.memory_space<vmem>>, vector<16x128xf32>
    tpu.vector_store %arg3[%c0_27, %c0_28], %163 {strides = array<i32>} : memref<16x128xf32, #tpu.memory_space<vmem>>, vector<16x128xf32>,
    return
  }
  func.func @transform_0(%arg0: i32) -> (i32, i32) {
    %c0_i32 = arith.constant 0 : i32
    %c0_i32_0 = arith.constant 0 : i32
    return %c0_i32, %arg0 : i32, i32
  }
  func.func @transform_1(%arg0: i32) -> (i32, i32) {
    %c0_i32 = arith.constant 0 : i32
    %c0_i32_0 = arith.constant 0 : i32
    return %c0_i32, %arg0 : i32, i32
  }
  func.func @transform_2(%arg0: i32) -> (i32, i32) {
    %c0_i32 = arith.constant 0 : i32
    %c0_i32_0 = arith.constant 0 : i32
    return %c0_i32, %arg0 : i32, i32
  }
}

</mosaic_0001>

<llo_original>
// kernel: learn_pose_forward_batched.1
$region0: #{learn_pose_forward_batched.1}
  #allocation0 [shape = 'u32[]', space=smem, size = 0x4, offset = 0x4, fixed_abs, tag = 'smem constant byte address 0x4 - core index']
  #allocation1 [shape = 'u32[144,128]{1,0:T(1,128)}', space=vmem, size = 0x12000, scoped, tag = 'internal scratch']
  %s0 = inlined_call_operand.vmem [shape: f32[4,128], index: 0, kind: input, shape index: {}]
  %s1 = inlined_call_operand.vmem [shape: f32[3,128], index: 1, kind: input, shape index: {}]
  %s2 = inlined_call_operand.hbm [shape: f32[16,128], index: 2, kind: output, shape index: {}]
  %s3 = sld [smem:[#allocation0]]
  $region18: #{learn_pose_forward_batched.1} parent=0
    _
  %s5 = ssub.s32 1, %s3
  %s6 = scalar_select 0, %s5, %s3
  $region1: #{learn_pose_forward_batched.1} parent=0
    #allocation2 [shape = 'u8[8192]{0}', space=vmem, size = 0x2000, scoped, tag = 'output window, operand 0, single buffered']
    #allocation3 [shape = 's32[1]{0}', space=sflag, size = 0x4, scoped, tag = 'scoped memory for learn_pose_forward_batched.1']
    %7 = vsyncpa [#allocation3], 0
    // Predicated region
    $region2: #{learn_pose_forward_batched.1} parent=1 // pred_check
      _
    $region3: #{learn_pose_forward_batched.1} parent=1 // pred_check_branch
      %9 = sbr.rel (0) target = $region5
    $region4: #{learn_pose_forward_batched.1} parent=1 // pred_region
      _
    $region5: #{learn_pose_forward_batched.1} parent=1 // pred_fallthru
      _
    // Predicated region
    $region6: #{learn_pose_forward_batched.1} parent=1 // pred_check
      _
    $region7: #{learn_pose_forward_batched.1} parent=1 // pred_check_branch
      %11 = sbr.rel (0) target = $region9
    $region8: #{learn_pose_forward_batched.1} parent=1 // pred_region
      _
    $region9: #{learn_pose_forward_batched.1} parent=1 // pred_fallthru
      _
    %v12 = vld [vmem:[%s0] sm:$0xf]
    %v13 = vld [vmem:[%s1] sm:$0x7]
    %v14 = vmul.f32 %v12, %v12
    %v16 = vrot.slane %v14, 1
    %v18 = vadd.f32 %v14, %v16
    %v19 = vrot.slane %v14, 2
    %v21 = vadd.f32 %v18, %v19
    %v22 = vrot.slane %v14, 3
    %v24 = vadd.f32 %v21, %v22
    %v25 = vmax.f32 %v24, 1e-24
    %v26 = vrsqrt.pop %v25
    %v27 = vmul.f32 %v12, %v26
    %v29 = vrot.slane %v26, 7
    %v31 = vmul.f32 %v12, %v29
    %v32 = vrot.slane %v26, 6
    %v34 = vmul.f32 %v12, %v32
    %v35 = vrot.slane %v26, 5
    %v37 = vmul.f32 %v12, %v35
    %v38 = vmul.f32 %v31, %v31
    %v39 = vmul.f32 %v34, %v34
    %v40 = vmul.f32 %v37, %v37
    %v42 = vrot.slane %v34, 1
    %v44 = vmul.f32 %v31, %v42
    %v46 = vrot.slane %v37, 2
    %v48 = vmul.f32 %v31, %v46
    %v49 = vrot.slane %v37, 1
    %v51 = vmul.f32 %v34, %v49
    %v53 = vrot.slane %v31, 1
    %v55 = vmul.f32 %v27, %v53
    %v56 = vrot.slane %v34, 2
    %v58 = vmul.f32 %v27, %v56
    %v59 = vrot.slane %v37, 3
    %v61 = vmul.f32 %v27, %v59
    %v63 = vrot.slane %v40, 1
    %v65 = vadd.f32 %v39, %v63
    %v66 = vmul.f32 %v65, 2.0
    %v67 = vsub.f32 1.0, %v66
    %v69 = vrot.slane %v61, 7
    %v71 = vsub.f32 %v44, %v69
    %v72 = vmul.f32 %v71, 2.0
    %v74 = vrot.slane %v58, 7
    %v76 = vadd.f32 %v48, %v74
    %v77 = vmul.f32 %v76, 2.0
    %v78 = vadd.f32 %v44, %v69
    %v79 = vmul.f32 %v78, 2.0
    %v80 = vrot.slane %v40, 2
    %v82 = vadd.f32 %v38, %v80
    %v83 = vmul.f32 %v82, 2.0
    %v84 = vsub.f32 1.0, %v83
    %v86 = vrot.slane %v55, 6
    %v88 = vsub.f32 %v51, %v86
    %v89 = vmul.f32 %v88, 2.0
    %v90 = vsub.f32 %v48, %v74
    %v91 = vmul.f32 %v90, 2.0
    %v92 = vadd.f32 %v51, %v86
    %v93 = vmul.f32 %v92, 2.0
    %v95 = vrot.slane %v39, 1
    %v97 = vadd.f32 %v38, %v95
    %v98 = vmul.f32 %v97, 2.0
    %v99 = vsub.f32 1.0, %v98
    %v100 = vlaneseq
    %v101 = vshrl.u32 %v100, 7
    %v102 = vadd.s32 %v101, 8
    %vm103 = vcmp.eq.s32.totalorder %v101, 0
    %vm104 = vcmp.eq.s32.totalorder %v102, 0
    %v105 = vlaneseq
    %v106 = vshrl.u32 %v105, 7
    %v107 = vsub.s32 2, %v106
    %v108 = vrot.slane %v67, %v107
    %v109 = vsel %vm103, %v108, 0.0
    %v110 = vsel %vm104, %v108, 0.0
    %v111 = vadd.f32 %v109, 0.0
    %v112 = vadd.f32 %v110, 0.0
    %vm113 = vcmp.eq.s32.totalorder %v101, 1
    %vm114 = vcmp.eq.s32.totalorder %v102, 1
    %v115 = vlaneseq
    %v116 = vshrl.u32 %v115, 7
    %v117 = vsub.s32 1, %v116
    %v118 = vrot.slane %v72, %v117
    %v119 = vsel %vm113, %v118, 0.0
    %v120 = vsel %vm114, %v118, 0.0
    %v121 = vadd.f32 %v111, %v119
    %v122 = vadd.f32 %v112, %v120
    %vm123 = vcmp.eq.s32.totalorder %v101, 2
    %vm124 = vcmp.eq.s32.totalorder %v102, 2
    %v125 = vlaneseq
    %v126 = vshrl.u32 %v125, 7
    %v127 = vsub.s32 1, %v126
    %v128 = vrot.slane %v77, %v127
    %v129 = vsel %vm123, %v128, 0.0
    %v130 = vsel %vm124, %v128, 0.0
    %v131 = vadd.f32 %v121, %v129
    %v132 = vadd.f32 %v122, %v130
    %vm133 = vcmp.eq.s32.totalorder %v101, 3
    %vm134 = vcmp.eq.s32.totalorder %v102, 3
    %v135 = vlaneseq
    %v136 = vshrl.u32 %v135, 7
    %v137 = vsub.s32 0, %v136
    %v138 = vrot.slane %v13, %v137
    %v139 = vsel %vm133, %v138, 0.0
    %v140 = vsel %vm134, %v138, 0.0
    %v141 = vadd.f32 %v131, %v139
    %v142 = vadd.f32 %v132, %v140
    %vm143 = vcmp.eq.s32.totalorder %v101, 4
    %vm144 = vcmp.eq.s32.totalorder %v102, 4
    %v145 = vlaneseq
    %v146 = vshrl.u32 %v145, 7
    %v147 = vsub.s32 1, %v146
    %v148 = vrot.slane %v79, %v147
    %v149 = vsel %vm143, %v148, 0.0
    %v150 = vsel %vm144, %v148, 0.0
    %v151 = vadd.f32 %v141, %v149
    %v152 = vadd.f32 %v142, %v150
    %vm153 = vcmp.eq.s32.totalorder %v101, 5
    %vm154 = vcmp.eq.s32.totalorder %v102, 5
    %v155 = vlaneseq
    %v156 = vshrl.u32 %v155, 7
    %v157 = vsub.s32 1, %v156
    %v158 = vrot.slane %v84, %v157
    %v159 = vsel %vm153, %v158, 0.0
    %v160 = vsel %vm154, %v158, 0.0
    %v161 = vadd.f32 %v151, %v159
    %v162 = vadd.f32 %v152, %v160
    %vm163 = vcmp.eq.s32.totalorder %v101, 6
    %vm164 = vcmp.eq.s32.totalorder %v102, 6
    %v165 = vlaneseq
    %v166 = vshrl.u32 %v165, 7
    %v167 = vsub.s32 2, %v166
    %v168 = vrot.slane %v89, %v167
    %v169 = vsel %vm163, %v168, 0.0
    %v170 = vsel %vm164, %v168, 0.0
    %v171 = vadd.f32 %v161, %v169
    %v172 = vadd.f32 %v162, %v170
    %vm173 = vcmp.eq.s32.totalorder %v101, 7
    %vm174 = vcmp.eq.s32.totalorder %v102, 7
    %v175 = vlaneseq
    %v176 = vshrl.u32 %v175, 7
    %v177 = vsub.s32 1, %v176
    %v178 = vrot.slane %v13, %v177
    %v179 = vsel %vm173, %v178, 0.0
    %v180 = vsel %vm174, %v178, 0.0
    %v181 = vadd.f32 %v171, %v179
    %v182 = vadd.f32 %v172, %v180
    %vm183 = vcmp.eq.s32.totalorder %v101, 8
    %vm184 = vcmp.eq.s32.totalorder %v102, 8
    %v185 = vlaneseq
    %v186 = vshrl.u32 %v185, 7
    %v187 = vsub.s32 1, %v186
    %v188 = vrot.slane %v91, %v187
    %v189 = vsel %vm183, %v188, 0.0
    %v190 = vsel %vm184, %v188, 0.0
    %v191 = vadd.f32 %v181, %v189
    %v192 = vadd.f32 %v182, %v190
    %vm193 = vcmp.eq.s32.totalorder %v101, 9
    %vm194 = vcmp.eq.s32.totalorder %v102, 9
    %v195 = vlaneseq
    %v196 = vshrl.u32 %v195, 7
    %v197 = vsub.s32 2, %v196
    %v198 = vrot.slane %v93, %v197
    %v199 = vsel %vm193, %v198, 0.0
    %v200 = vsel %vm194, %v198, 0.0
    %v201 = vadd.f32 %v191, %v199
    %v202 = vadd.f32 %v192, %v200
    %vm203 = vcmp.eq.s32.totalorder %v101, 10
    %vm204 = vcmp.eq.s32.totalorder %v102, 10
    %v205 = vlaneseq
    %v206 = vshrl.u32 %v205, 7
    %v207 = vsub.s32 1, %v206
    %v208 = vrot.slane %v99, %v207
    %v209 = vsel %vm203, %v208, 0.0
    %v210 = vsel %vm204, %v208, 0.0
    %v211 = vadd.f32 %v201, %v209
    %v212 = vadd.f32 %v202, %v210
    %vm213 = vcmp.eq.s32.totalorder %v101, 11
    %vm214 = vcmp.eq.s32.totalorder %v102, 11
    %v215 = vlaneseq
    %v216 = vshrl.u32 %v215, 7
    %v217 = vsub.s32 2, %v216
    %v218 = vrot.slane %v13, %v217
    %v219 = vsel %vm213, %v218, 0.0
    %v220 = vsel %vm214, %v218, 0.0
    %v221 = vadd.f32 %v211, %v219
    %v222 = vadd.f32 %v212, %v220
    %vm223 = vcmp.eq.s32.totalorder %v101, 15
    %vm224 = vcmp.eq.s32.totalorder %v102, 15
    %v225 = vsel %vm223, 1.0, 0.0
    %v226 = vsel %vm224, 1.0, 0.0
    %v227 = vadd.f32 %v221, %v225
    %v228 = vadd.f32 %v222, %v226
    %229 = vst [vmem:[#allocation2] sm:$0xff] %v227
    %230 = vst [vmem:[#allocation2 + $0x8] sm:$0xff] %v228
    // Predicated region
    $region10: #{learn_pose_forward_batched.1} parent=1 // pred_check
      _
    $region11: #{learn_pose_forward_batched.1} parent=1 // pred_check_branch
      %232 = sbr.rel (0) target = $region13
    $region12: #{learn_pose_forward_batched.1} parent=1 // pred_region
      %s234 = ssub.s32 256, 256
      %235 = vsyncadd [#allocation3], %s234
      %s236 = sshll.u32 [#allocation2], 4
      %s237 = int_to_ptr.vmem [resolvable:$true] %s236
      %242 = dma.vmem_to_hbm [thread:$0]  %s237, 256, %s2, [#allocation3], 128, 128, 8
    $region13: #{learn_pose_forward_batched.1} parent=1 // pred_fallthru
      _
    // Predicated region
    $region14: #{learn_pose_forward_batched.1} parent=1 // pred_check
      _
    $region15: #{learn_pose_forward_batched.1} parent=1 // pred_check_branch
      %244 = sbr.rel (0) target = $region17
    $region16: #{learn_pose_forward_batched.1} parent=1 // pred_region
      %245 = dma.done [#allocation3], 256
    $region17: #{learn_pose_forward_batched.1} parent=1 // pred_fallthru
      _
    %246 = vsyncpa [#allocation3], 1

</llo_original>
